<compile_context>
chip_gen: v5e
topology: v5e:2x2
jax: 0.10.0
libtpu: 0.0.40
codegen_flags: <defaults>
</compile_context>

<pallas_src>
import functools

import jax
import jax.numpy as jnp
from jax import lax
from jax.experimental import pallas as pl
from jax.experimental.pallas import tpu as pltpu


def cbow_kernel(idx_ref, e1t_ref, w2t_ref, bias_ref, out_ref):
    C, TB = idx_ref.shape          # context size, batch tile (batch on lanes)
    H, V_in = e1t_ref.shape        # hidden (128), input vocab
    VP = w2t_ref.shape[0]          # padded output vocab (multiple of 128)

    idx = idx_ref[...]                                          # (C, TB) int32
    vocab = lax.broadcasted_iota(jnp.int32, (V_in, TB), 0)      # word id on sublanes

    # Fused embedding gather + context sum (transposed / batch-on-lanes layout):
    # counts[v, b] = #occurrences of word v in example b's context.
    counts = jnp.zeros((V_in, TB), jnp.int32)
    for c in range(C):                                          # C is small & static
        counts = counts + (idx[c:c + 1, :] == vocab).astype(jnp.int32)
    counts = counts.astype(jnp.bfloat16)                        # exact: values <= C

    b = bias_ref[...]                                           # (W, 2) packed f32 biases

    # gather-sum + linear1 in ONE bf16 MXU matmul (E1 = emb @ W1 precomputed):
    #   h[:, b] = relu(E1^T @ counts[:, b] + b1)
    h = jnp.dot(e1t_ref[...], counts, preferred_element_type=jnp.float32)
    h = jnp.maximum(h + b[:H, 0:1], 0.0)                        # (H, TB) f32

    # linear2 (vocab padded to VP; padded rows carry f32 bias -1e30)
    logits = jnp.dot(w2t_ref[...], h.astype(jnp.bfloat16),
                     preferred_element_type=jnp.float32) + b[:VP, 1:2]   # (VP, TB)

    # log-softmax over the vocab (sublane) axis; padded rows exp-underflow to 0.
    m = jnp.max(logits, axis=0, keepdims=True)
    z = logits - m
    lse = jnp.log(jnp.sum(jnp.exp(z), axis=0, keepdims=True))
    out_ref[...] = z - lse                                      # (VP, TB) f32


@functools.partial(jax.jit, static_argnames=("block_b",))
def cbow_forward_batched(idx, emb_table, w1, b1, w2, b2, *, block_b=128):
    """idx: (B, C) int32 context indices. Returns (B, V_out) f32 log-probs."""
    B, C = idx.shape
    V_in, D = emb_table.shape
    H = w1.shape[1]
    V_out = w2.shape[1]

    # Algebraic fold (ReLU comes after the affine, so this is exact):
    #   sum_c emb[idx_c] @ W1 == counts @ (emb @ W1)
    e1 = jnp.dot(emb_table.astype(jnp.float32), w1.astype(jnp.float32),
                 precision=lax.Precision.HIGHEST)               # (V_in, H) f32
    e1t = e1.T.astype(jnp.bfloat16)                             # (H, V_in) bf16

    # Pad the output vocab to a lane-dense multiple of 128; weights bf16.
    VP = max(128, pl.cdiv(V_out, 128) * 128)
    w2t = jnp.zeros((VP, H), jnp.bfloat16).at[:V_out, :].set(
        w2.T.astype(jnp.bfloat16))                              # (VP, H) bf16

    # Pack both bias vectors (as f32 columns) into one buffer -> one DMA.
    W = max(H, VP)
    b2p = jnp.full((VP,), -1e30, jnp.float32).at[:V_out].set(b2.astype(jnp.float32))
    biases = jnp.zeros((W, 2), jnp.float32)
    biases = biases.at[:H, 0].set(b1.astype(jnp.float32))
    biases = biases.at[:VP, 1].set(b2p)

    # Batch goes on the 128-lane axis: indices as (C, B), padded to the tile
    # (dummy columns use index 0 and are sliced away below).
    BP = pl.cdiv(B, block_b) * block_b
    idx_t = idx.T.astype(jnp.int32)                             # (C, B)
    if BP != B:
        idx_t = jnp.concatenate([idx_t, jnp.zeros((C, BP - B), jnp.int32)], axis=1)

    # TODO(synk): for realistic vocab sizes keep the embedding table in HBM
    # (memory_space=pl.ANY) and DMA-gather context rows via scalar prefetch /
    # make_async_copy instead of the O(B*V_in) one-hot counts matmul, and set
    # pipeline_mode=pl.Buffered(1) on the grid-invariant weight blocks.
    out = pl.pallas_call(
        cbow_kernel,
        out_shape=jax.ShapeDtypeStruct((VP, BP), jnp.float32),
        grid_spec=pltpu.PrefetchScalarGridSpec(
            num_scalar_prefetch=0,
            grid=(BP // block_b,),
            in_specs=[
                pl.BlockSpec((C, block_b), lambda i: (0, i)),   # indices (lane-dense)
                pl.BlockSpec((H, V_in), lambda i: (0, 0)),      # E1^T (resident)
                pl.BlockSpec((VP, H), lambda i: (0, 0)),        # W2^T padded (resident)
                pl.BlockSpec((W, 2), lambda i: (0, 0)),         # packed biases (resident)
            ],
            out_specs=pl.BlockSpec((VP, block_b), lambda i: (0, i)),
        ),
        compiler_params=pltpu.CompilerParams(
            # Batch tiles are independent: megacore-shard on v7x (keep grid >= 2
            # there, e.g. block_b=128 at B=256).  On single-TC v5e/v6e the grid
            # is a serial loop -> sweep block_b upward (128..512) to cut the
            # fixed per-step overhead.
            dimension_semantics=("parallel",),
        ),
    )(idx_t, e1t, w2t, biases)

    return out[:V_out, :B].T


def cbow_forward(inputs, emb_table, w1, b1, w2, b2):
    """Single example (matches the PyTorch module forward). inputs: (C,) int32."""
    return cbow_forward_batched(inputs[None, :], emb_table, w1, b1, w2, b2,
                                block_b=8)[0]


if __name__ == "__main__":
    # Small, deterministic problem sizes consistent with the module.
    INPUT_VOCAB = 50
    OUTPUT_VOCAB = 64
    EMBED_DIM = 32
    HIDDEN = 128          # fixed by the module (linear1 -> 128)
    CONTEXT = 8           # context words per example
    BATCH = 256           # 2 grid steps of 128 -> keeps both v7x TCs busy

    key = jax.random.PRNGKey(0)
    k_emb, k_w1, k_b1, k_w2, k_b2, k_in = jax.random.split(key, 6)

    emb_table = jax.random.normal(k_emb, (INPUT_VOCAB, EMBED_DIM), jnp.float32) * 0.1
    w1 = jax.random.normal(k_w1, (EMBED_DIM, HIDDEN), jnp.float32) * 0.1
    b1 = jax.random.normal(k_b1, (HIDDEN,), jnp.float32) * 0.1
    w2 = jax.random.normal(k_w2, (HIDDEN, OUTPUT_VOCAB), jnp.float32) * 0.1
    b2 = jax.random.normal(k_b2, (OUTPUT_VOCAB,), jnp.float32) * 0.1

    idx = jax.random.randint(k_in, (BATCH, CONTEXT), 0, INPUT_VOCAB, jnp.int32)

    out = jax.block_until_ready(cbow_forward_batched(idx, emb_table, w1, b1, w2, b2))
    assert out.shape == (BATCH, OUTPUT_VOCAB)

    # Sanity: log-softmax output must sum (in prob space) to ~1 per example.
    assert float(jnp.max(jnp.abs(jnp.sum(jnp.exp(out), axis=-1) - 1.0))) < 1e-4

    # Cross-check against a pure-JAX f32 reference of the same forward pass.
    emb_sum = jnp.take(emb_table, idx, axis=0).sum(axis=1)        # (B, D)
    h_ref = jnp.maximum(emb_sum @ w1 + b1, 0.0)
    ref = jax.nn.log_softmax(h_ref @ w2 + b2, axis=-1)
    # bf16 MXU operands (with f32 accumulation) -> small numeric tolerance.
    err = float(jnp.max(jnp.abs(out - ref)))
    assert jnp.allclose(out, ref, atol=5e-3, rtol=5e-3), err

    # Single-example path (matches the PyTorch forward signature).
    out1 = jax.block_until_ready(cbow_forward(idx[0], emb_table, w1, b1, w2, b2))
    assert out1.shape == (OUTPUT_VOCAB,)
    assert jnp.allclose(out1, ref[0], atol=5e-3, rtol=5e-3)

    print("KERNEL_OK")
</pallas_src>

<mosaic_0001>
module attributes {stable_mosaic.version = 11 : i64} {
  func.func @cbow_kernel(%arg0: i32, %arg1: memref<8x128xi32, #tpu.memory_space<vmem>>, %arg2: memref<128x50xbf16, #tpu.memory_space<vmem>>, %arg3: memref<128x128xbf16, #tpu.memory_space<vmem>>, %arg4: memref<128x2xf32, #tpu.memory_space<vmem>>, %arg5: memref<128x128xf32, #tpu.memory_space<vmem>>) attributes {dimension_semantics = [#tpu.dimension_semantics<parallel>], iteration_bounds = array<i64: 2>, scalar_prefetch = 0 : i64, scratch_operands = 0 : i64, tpu.core_type = #tpu.core_type<tc>, window_params = [{transform_indices = @transform_0, window_bounds = array<i64: 8, 128>}, {pipeline_mode = #tpu.pipeline_mode<synchronous>, transform_indices = @transform_1, window_bounds = array<i64: 128, 50>}, {pipeline_mode = #tpu.pipeline_mode<synchronous>, transform_indices = @transform_2, window_bounds = array<i64: 128, 128>}, {pipeline_mode = #tpu.pipeline_mode<synchronous>, transform_indices = @transform_3, window_bounds = array<i64: 128, 2>}, {transform_indices = @transform_4, window_bounds = array<i64: 128, 128>}]} {
    %c0 = arith.constant 0 : index
    %c0_0 = arith.constant 0 : index
    %0 = vector.load %arg1[%c0, %c0_0] : memref<8x128xi32, #tpu.memory_space<vmem>>, vector<8x128xi32>
    %1 = tpu.iota {dimensions = array<i32: 0>} : vector<50x128xi32>
    %c0_i32 = arith.constant 0 : i32
    %2 = vector.broadcast %c0_i32 : i32 to vector<50x128xi32>
    %3 = vector.extract_strided_slice %0 {offsets = [0, 0], sizes = [1, 128], strides = [1, 1]} : vector<8x128xi32> to vector<1x128xi32>
    %4 = vector.broadcast %3 : vector<1x128xi32> to vector<50x128xi32>
    %5 = arith.cmpi eq, %4, %1 : vector<50x128xi32>
    %6 = arith.extui %5 : vector<50x128xi1> to vector<50x128xi32>
    %7 = arith.addi %2, %6 : vector<50x128xi32>
    %8 = vector.extract_strided_slice %0 {offsets = [1, 0], sizes = [1, 128], strides = [1, 1]} : vector<8x128xi32> to vector<1x128xi32>
    %9 = vector.broadcast %8 : vector<1x128xi32> to vector<50x128xi32>
    %10 = arith.cmpi eq, %9, %1 : vector<50x128xi32>
    %11 = arith.extui %10 : vector<50x128xi1> to vector<50x128xi32>
    %12 = arith.addi %7, %11 : vector<50x128xi32>
    %13 = vector.extract_strided_slice %0 {offsets = [2, 0], sizes = [1, 128], strides = [1, 1]} : vector<8x128xi32> to vector<1x128xi32>
    %14 = vector.broadcast %13 : vector<1x128xi32> to vector<50x128xi32>
    %15 = arith.cmpi eq, %14, %1 : vector<50x128xi32>
    %16 = arith.extui %15 : vector<50x128xi1> to vector<50x128xi32>
    %17 = arith.addi %12, %16 : vector<50x128xi32>
    %18 = vector.extract_strided_slice %0 {offsets = [3, 0], sizes = [1, 128], strides = [1, 1]} : vector<8x128xi32> to vector<1x128xi32>
    %19 = vector.broadcast %18 : vector<1x128xi32> to vector<50x128xi32>
    %20 = arith.cmpi eq, %19, %1 : vector<50x128xi32>
    %21 = arith.extui %20 : vector<50x128xi1> to vector<50x128xi32>
    %22 = arith.addi %17, %21 : vector<50x128xi32>
    %23 = vector.extract_strided_slice %0 {offsets = [4, 0], sizes = [1, 128], strides = [1, 1]} : vector<8x128xi32> to vector<1x128xi32>
    %24 = vector.broadcast %23 : vector<1x128xi32> to vector<50x128xi32>
    %25 = arith.cmpi eq, %24, %1 : vector<50x128xi32>
    %26 = arith.extui %25 : vector<50x128xi1> to vector<50x128xi32>
    %27 = arith.addi %22, %26 : vector<50x128xi32>
    %28 = vector.extract_strided_slice %0 {offsets = [5, 0], sizes = [1, 128], strides = [1, 1]} : vector<8x128xi32> to vector<1x128xi32>
    %29 = vector.broadcast %28 : vector<1x128xi32> to vector<50x128xi32>
    %30 = arith.cmpi eq, %29, %1 : vector<50x128xi32>
    %31 = arith.extui %30 : vector<50x128xi1> to vector<50x128xi32>
    %32 = arith.addi %27, %31 : vector<50x128xi32>
    %33 = vector.extract_strided_slice %0 {offsets = [6, 0], sizes = [1, 128], strides = [1, 1]} : vector<8x128xi32> to vector<1x128xi32>
    %34 = vector.broadcast %33 : vector<1x128xi32> to vector<50x128xi32>
    %35 = arith.cmpi eq, %34, %1 : vector<50x128xi32>
    %36 = arith.extui %35 : vector<50x128xi1> to vector<50x128xi32>
    %37 = arith.addi %32, %36 : vector<50x128xi32>
    %38 = vector.extract_strided_slice %0 {offsets = [7, 0], sizes = [1, 128], strides = [1, 1]} : vector<8x128xi32> to vector<1x128xi32>
    %39 = vector.broadcast %38 : vector<1x128xi32> to vector<50x128xi32>
    %40 = arith.cmpi eq, %39, %1 : vector<50x128xi32>
    %41 = arith.extui %40 : vector<50x128xi1> to vector<50x128xi32>
    %42 = arith.addi %37, %41 : vector<50x128xi32>
    %43 = arith.sitofp %42 : vector<50x128xi32> to vector<50x128xbf16>
    %c0_1 = arith.constant 0 : index
    %c0_2 = arith.constant 0 : index
    %44 = vector.load %arg4[%c0_1, %c0_2] : memref<128x2xf32, #tpu.memory_space<vmem>>, vector<128x2xf32>
    %c0_3 = arith.constant 0 : index
    %c0_4 = arith.constant 0 : index
    %45 = vector.load %arg2[%c0_3, %c0_4] : memref<128x50xbf16, #tpu.memory_space<vmem>>, vector<128x50xbf16>
    %cst = arith.constant dense<0.000000e+00> : vector<128x128xf32>
    %46 = tpu.matmul %45, %43, %cst {dimension_numbers = #tpu.dot_dimension_numbers<[1], [0], [0], [1], [0, 0, 1, 1], [], []>} : vector<128x50xbf16>, vector<50x128xbf16>, vector<128x128xf32> -> vector<128x128xf32>
    %47 = vector.extract_strided_slice %44 {offsets = [0, 0], sizes = [128, 1], strides = [1, 1]} : vector<128x2xf32> to vector<128x1xf32>
    %48 = vector.broadcast %47 : vector<128x1xf32> to vector<128x128xf32>
    %49 = arith.addf %46, %48 : vector<128x128xf32>
    %cst_5 = arith.constant 0.000000e+00 : f32
    %50 = vector.broadcast %cst_5 : f32 to vector<128x128xf32>
    %51 = arith.maximumf %49, %50 : vector<128x128xf32>
    %c0_6 = arith.constant 0 : index
    %c0_7 = arith.constant 0 : index
    %52 = vector.load %arg3[%c0_6, %c0_7] : memref<128x128xbf16, #tpu.memory_space<vmem>>, vector<128x128xbf16>
    %53 = arith.truncf %51 : vector<128x128xf32> to vector<128x128xbf16>
    %cst_8 = arith.constant dense<0.000000e+00> : vector<128x128xf32>
    %54 = tpu.matmul %52, %53, %cst_8 {dimension_numbers = #tpu.dot_dimension_numbers<[1], [0], [0], [1], [0, 0, 1, 1], [], []>} : vector<128x128xbf16>, vector<128x128xbf16>, vector<128x128xf32> -> vector<128x128xf32>
    %55 = vector.extract_strided_slice %44 {offsets = [0, 1], sizes = [128, 1], strides = [1, 1]} : vector<128x2xf32> to vector<128x1xf32>
    %56 = vector.broadcast %55 : vector<128x1xf32> to vector<128x128xf32>
    %57 = arith.addf %54, %56 : vector<128x128xf32>
    %cst_9 = arith.constant dense<0xFF800000> : vector<128xf32>
    %58 = vector.multi_reduction <maximumf>, %57, %cst_9 [0] : vector<128x128xf32> to vector<128xf32>
    %59 = vector.shape_cast %58 : vector<128xf32> to vector<1x128xf32>
    %60 = vector.broadcast %59 : vector<1x128xf32> to vector<128x128xf32>
    %61 = arith.subf %57, %60 : vector<128x128xf32>
    %62 = math.exp %61 : vector<128x128xf32>
    %cst_10 = arith.constant dense<0.000000e+00> : vector<128xf32>
    %63 = vector.multi_reduction <add>, %62, %cst_10 [0] : vector<128x128xf32> to vector<128xf32>
    %64 = vector.shape_cast %63 : vector<128xf32> to vector<1x128xf32>
    %65 = math.log %64 : vector<1x128xf32>
    %66 = vector.broadcast %65 : vector<1x128xf32> to vector<128x128xf32>
    %67 = arith.subf %61, %66 : vector<128x128xf32>
    %c0_11 = arith.constant 0 : index
    %c0_12 = arith.constant 0 : index
    %68 = vector.load %arg5[%c0_11, %c0_12] : memref<128x128xf32, #tpu.memory_space<vmem>>, vector<128x128xf32>
    tpu.vector_store %arg5[%c0_11, %c0_12], %67 {strides = array<i32>} : memref<128x128xf32, #tpu.memory_space<vmem>>, vector<128x128xf32>,
    return
  }
  func.func @transform_0(%arg0: i32) -> (i32, i32) {
    %c0_i32 = arith.constant 0 : i32
    %c0_i32_0 = arith.constant 0 : i32
    return %c0_i32, %arg0 : i32, i32
  }
  func.func @transform_1(%arg0: i32) -> (i32, i32) {
    %c0_i32 = arith.constant 0 : i32
    %c0_i32_0 = arith.constant 0 : i32
    %c0_i32_1 = arith.constant 0 : i32
    return %c0_i32, %c0_i32_0 : i32, i32
  }
  func.func @transform_2(%arg0: i32) -> (i32, i32) {
    %c0_i32 = arith.constant 0 : i32
    %c0_i32_0 = arith.constant 0 : i32
    %c0_i32_1 = arith.constant 0 : i32
    return %c0_i32, %c0_i32_0 : i32, i32
  }
  func.func @transform_3(%arg0: i32) -> (i32, i32) {
    %c0_i32 = arith.constant 0 : i32
    %c0_i32_0 = arith.constant 0 : i32
    %c0_i32_1 = arith.constant 0 : i32
    return %c0_i32, %c0_i32_0 : i32, i32
  }
  func.func @transform_4(%arg0: i32) -> (i32, i32) {
    %c0_i32 = arith.constant 0 : i32
    %c0_i32_0 = arith.constant 0 : i32
    return %c0_i32, %arg0 : i32, i32
  }
}

</mosaic_0001>

<llo_original>
// kernel: cbow_forward_batched.1
$region0: #{cbow_forward_batched.1}
  #allocation0 [shape = 'u32[]', space=smem, size = 0x4, offset = 0x4, fixed_abs, tag = 'smem constant byte address 0x4 - core index']
  #allocation1 [shape = 'u32[72,128]{1,0:T(1,128)}', space=vmem, size = 0x9000, scoped, tag = 'internal scratch']
  %s0 = inlined_call_operand.vmem [shape: s32[8,256], index: 0, kind: input, shape index: {}]
  %s1 = inlined_call_operand.vmem [shape: bf16[128,50], index: 1, kind: input, shape index: {}]
  %s2 = inlined_call_operand.vmem [shape: bf16[128,128], index: 2, kind: input, shape index: {}]
  %s3 = inlined_call_operand.vmem [shape: f32[128,2], index: 3, kind: input, shape index: {}]
  %s4 = inlined_call_operand.vmem [shape: f32[128,256], index: 4, kind: output, shape index: {}]
  %s5 = sld [smem:[#allocation0]]
  $region83: #{cbow_forward_batched.1} parent=0
    _
  %s7 = ssub.s32 1, %s5
  %s8 = scalar_select 0, %s7, %s5
  $region1: #{cbow_forward_batched.1} parent=0
    #allocation2 [shape = 'u8[131072]{0}', space=vmem, size = 0x20000, scoped, tag = 'output window, operand 0']
    loop: start=0, step=1, limit=4
    $region2: #{cbow_forward_batched.1} parent=1 // loop_pre_header
      _
    $region3: #{cbow_forward_batched.1} parent=1 // loop_header
      %s10 = sphi 0, %s14
      %p11 = scmp.ge.s32.totalorder %s10, 4
      %s20 = sphi 0, %s22
      %s23 = sphi 0, %s20
      %s24 = sphi 0, %s23
      %s40 = sphi 0, %s24
      %s44 = sphi 0, %s44
      %s46 = sphi 0, %s44
      %s47 = sphi 0, %s46
      %s61 = sphi 0, %s47
      %s65 = sphi 0, %s65
      %s67 = sphi 0, %s65
      %s68 = sphi 0, %s67
      %s82 = sphi 0, %s68
      %s86 = sphi 0, %s86
      %s88 = sphi 0, %s86
      %s89 = sphi 0, %s88
      %s103 = sphi 0, %s89
      %s109 = sphi 0, %s111
      %s112 = sphi 0, %s109
      %s113 = sphi 0, %s112
      %s129 = sphi 0, %s113
    $region4: #{cbow_forward_batched.1} parent=1 // loop_header_branch
      %13 = sbr.rel (%p11) target = $region8
    $region5: #{cbow_forward_batched.1} parent=1 // loop_body
      %s15 = ssub.s32 %s10, 1
      %s16 = ssub.s32 %s10, 2
      %s17 = sadd.s32 %s10, 1
      %s18 = ssub.s32 %s10, %s17
      %p19 = scmp.eq.s32.totalorder %s18, 0
      %s21 = sadd.s32 %s20, 1
      %s22 = scalar_select %p19, %s20, %s21
      %p25 = pneg %p19
      %p26 = scmp.eq.s32.totalorder %s10, 1
      %p27 = por %p25, %p26
      %p28 = scmp.ne.s32.totalorder %s20, %s23
      %p29 = scmp.eq.s32.totalorder %s10, 0
      %p30 = por %p28, %p29
      %p31 = scmp.ne.s32.totalorder %s20, %s23
      %p32 = scmp.eq.s32.totalorder %s15, 1
      %p33 = por %p31, %p32
      %p34 = scmp.ne.s32.totalorder %s23, %s24
      %p35 = scmp.eq.s32.totalorder %s15, 0
      %p36 = por %p34, %p35
      %p37 = scmp.ne.s32.totalorder %s23, %s24
      %p38 = scmp.eq.s32.totalorder %s16, 1
      %p39 = por %p37, %p38
      %p41 = scmp.ne.s32.totalorder %s24, %s40
      %p42 = scmp.eq.s32.totalorder %s16, 0
      %p43 = por %p41, %p42
      %s45 = sadd.s32 %s44, 1
      %p48 = scmp.eq.s32.totalorder %s10, 1
      %p49 = scmp.ne.s32.totalorder %s44, %s46
      %p50 = scmp.eq.s32.totalorder %s10, 0
      %p51 = por %p49, %p50
      %p52 = scmp.ne.s32.totalorder %s44, %s46
      %p53 = scmp.eq.s32.totalorder %s15, 1
      %p54 = por %p52, %p53
      %p55 = scmp.ne.s32.totalorder %s46, %s47
      %p56 = scmp.eq.s32.totalorder %s15, 0
      %p57 = por %p55, %p56
      %p58 = scmp.ne.s32.totalorder %s46, %s47
      %p59 = scmp.eq.s32.totalorder %s16, 1
      %p60 = por %p58, %p59
      %p62 = scmp.ne.s32.totalorder %s47, %s61
      %p63 = scmp.eq.s32.totalorder %s16, 0
      %p64 = por %p62, %p63
      %s66 = sadd.s32 %s65, 1
      %p69 = scmp.eq.s32.totalorder %s10, 1
      %p70 = scmp.ne.s32.totalorder %s65, %s67
      %p71 = scmp.eq.s32.totalorder %s10, 0
      %p72 = por %p70, %p71
      %p73 = scmp.ne.s32.totalorder %s65, %s67
      %p74 = scmp.eq.s32.totalorder %s15, 1
      %p75 = por %p73, %p74
      %p76 = scmp.ne.s32.totalorder %s67, %s68
      %p77 = scmp.eq.s32.totalorder %s15, 0
      %p78 = por %p76, %p77
      %p79 = scmp.ne.s32.totalorder %s67, %s68
      %p80 = scmp.eq.s32.totalorder %s16, 1
      %p81 = por %p79, %p80
      %p83 = scmp.ne.s32.totalorder %s68, %s82
      %p84 = scmp.eq.s32.totalorder %s16, 0
      %p85 = por %p83, %p84
      %s87 = sadd.s32 %s86, 1
      %p90 = scmp.eq.s32.totalorder %s10, 1
      %p91 = scmp.ne.s32.totalorder %s86, %s88
      %p92 = scmp.eq.s32.totalorder %s10, 0
      %p93 = por %p91, %p92
      %p94 = scmp.ne.s32.totalorder %s86, %s88
      %p95 = scmp.eq.s32.totalorder %s15, 1
      %p96 = por %p94, %p95
      %p97 = scmp.ne.s32.totalorder %s88, %s89
      %p98 = scmp.eq.s32.totalorder %s15, 0
      %p99 = por %p97, %p98
      %p100 = scmp.ne.s32.totalorder %s88, %s89
      %p101 = scmp.eq.s32.totalorder %s16, 1
      %p102 = por %p100, %p101
      %p104 = scmp.ne.s32.totalorder %s89, %s103
      %p105 = scmp.eq.s32.totalorder %s16, 0
      %p106 = por %p104, %p105
      %s107 = ssub.s32 %s10, %s17
      %p108 = scmp.eq.s32.totalorder %s107, 0
      %s110 = sadd.s32 %s109, 1
      %s111 = scalar_select %p108, %s109, %s110
      %p114 = pneg %p108
      %p115 = scmp.eq.s32.totalorder %s10, 1
      %p116 = por %p114, %p115
      %p117 = scmp.ne.s32.totalorder %s109, %s112
      %p118 = scmp.eq.s32.totalorder %s10, 0
      %p119 = por %p117, %p118
      %p120 = scmp.ne.s32.totalorder %s109, %s112
      %p121 = scmp.eq.s32.totalorder %s15, 1
      %p122 = por %p120, %p121
      %p123 = scmp.ne.s32.totalorder %s112, %s113
      %p124 = scmp.eq.s32.totalorder %s15, 0
      %p125 = por %p123, %p124
      %p126 = scmp.ne.s32.totalorder %s112, %s113
      %p127 = scmp.eq.s32.totalorder %s16, 1
      %p128 = por %p126, %p127
      %p130 = scmp.ne.s32.totalorder %s113, %s129
      %p131 = scmp.eq.s32.totalorder %s16, 0
      %p132 = por %p130, %p131
      %p133 = scmp.le.s32.totalorder 1, %s10
      %p134 = scmp.lt.s32.totalorder %s10, 3
      %p135 = pnand %p133, %p134
      %p136 = pneg %p135
      // Predicated region
      $region9: #{cbow_forward_batched.1} parent=5 // pred_check
        _
      $region10: #{cbow_forward_batched.1} parent=5 // pred_check_branch
        %138 = sbr.rel (%p135) target = $region12
      $region11: #{cbow_forward_batched.1} parent=5 // pred_region
        %s139 = ssub.s32 %s10, 1
        // Predicated region
        $region13: #{cbow_forward_batched.1} parent=11 // pred_check
          %p140 = pneg %p57
        $region14: #{cbow_forward_batched.1} parent=11 // pred_check_branch
          %142 = sbr.rel (%p140) target = $region16
        $region15: #{cbow_forward_batched.1} parent=11 // pred_region
          _
        $region16: #{cbow_forward_batched.1} parent=11 // pred_fallthru
          _
        // Predicated region
        $region17: #{cbow_forward_batched.1} parent=11 // pred_check
          %p143 = pneg %p78
        $region18: #{cbow_forward_batched.1} parent=11 // pred_check_branch
          %145 = sbr.rel (%p143) target = $region20
        $region19: #{cbow_forward_batched.1} parent=11 // pred_region
          _
        $region20: #{cbow_forward_batched.1} parent=11 // pred_fallthru
          _
        // Predicated region
        $region21: #{cbow_forward_batched.1} parent=11 // pred_check
          %p146 = pneg %p99
        $region22: #{cbow_forward_batched.1} parent=11 // pred_check_branch
          %148 = sbr.rel (%p146) target = $region24
        $region23: #{cbow_forward_batched.1} parent=11 // pred_region
          _
        $region24: #{cbow_forward_batched.1} parent=11 // pred_fallthru
          _
      $region12: #{cbow_forward_batched.1} parent=5 // pred_fallthru
        _
      %p149 = scmp.lt.s32.totalorder %s10, 2
      // Predicated region
      $region25: #{cbow_forward_batched.1} parent=5 // pred_check
        %p150 = pneg %p149
      $region26: #{cbow_forward_batched.1} parent=5 // pred_check_branch
        %152 = sbr.rel (%p150) target = $region28
      $region27: #{cbow_forward_batched.1} parent=5 // pred_region
        // Predicated region
        $region29: #{cbow_forward_batched.1} parent=27 // pred_check
          %p153 = pneg %p30
        $region30: #{cbow_forward_batched.1} parent=27 // pred_check_branch
          %155 = sbr.rel (%p153) target = $region32
        $region31: #{cbow_forward_batched.1} parent=27 // pred_region
          %p156 = scmp.lt.s32.totalorder %s10, 1
          %s157 = scalar_select %p156, %s10, 1
          %s158 = smul.addr %s157, 8
          %s159 = scalar_lea.vmem %s0, %s158
        $region32: #{cbow_forward_batched.1} parent=27 // pred_fallthru
          _
      $region28: #{cbow_forward_batched.1} parent=5 // pred_fallthru
        _
      %p160 = scmp.le.s32.totalorder 1, %s10
      %p161 = scmp.lt.s32.totalorder %s10, 3
      %p162 = pnand %p160, %p161
      %p163 = pneg %p162
      // Predicated region
      $region33: #{cbow_forward_batched.1} parent=5 // pred_check
        _
      $region34: #{cbow_forward_batched.1} parent=5 // pred_check_branch
        %165 = sbr.rel (%p162) target = $region36
      $region35: #{cbow_forward_batched.1} parent=5 // pred_region
        %s166 = ssub.s32 %s10, 1
        %p167 = scmp.lt.s32.totalorder %s15, 1
        %s168 = scalar_select %p167, %s15, 1
        %s169 = smul.addr %s168, 8
        %s170 = scalar_lea.vmem %s0, %s169
        %p171 = pneg %p36
        %p172 = pneg %p33
        %p173 = pneg %p57
        %p174 = pneg %p54
        %p175 = pneg %p78
        %p176 = pneg %p75
        %p177 = pneg %p99
        %p178 = pneg %p96
        %p179 = pneg %p125
        %p180 = pneg %p122
        %s181 = sand.u32 %s112, 1
        %s182 = sand.u32 %s112, 1
        %s183 = smul.addr %s182, 128
        %s184 = scalar_lea.vmem [#allocation2], %s183
        %p185 = scmp.lt.s32.totalorder %s15, 1
        %s186 = scalar_select %p185, %s15, 1
        %s187 = smul.addr %s186, 8
        %s188 = scalar_lea.vmem %s0, %s187
        %v190 = vld [vmem:[%s188] sm:$0xff]
        %v191 = vlaneseq
        %v192 = vshrl.u32 %v191, 7
        %v193 = vadd.s32 %v192, 8
        %v194 = vadd.s32 %v192, 16
        %v195 = vadd.s32 %v192, 24
        %v196 = vadd.s32 %v192, 32
        %v197 = vadd.s32 %v192, 40
        %v198 = vadd.s32 %v192, 48
        %v199 = vperm.slane %v190, 0
        %vm200 = vcmp.eq.s32.totalorder %v199, %v192
        %vm201 = vcmp.eq.s32.totalorder %v199, %v193
        %vm202 = vcmp.eq.s32.totalorder %v199, %v194
        %vm203 = vcmp.eq.s32.totalorder %v199, %v195
        %vm204 = vcmp.eq.s32.totalorder %v199, %v196
        %vm205 = vcmp.eq.s32.totalorder %v199, %v197
        %vm206 = vcmp.eq.s32.totalorder %v199, %v198
        %v207 = vsel %vm200, 1, 0
        %v208 = vsel %vm201, 1, 0
        %v209 = vsel %vm202, 1, 0
        %v210 = vsel %vm203, 1, 0
        %v211 = vsel %vm204, 1, 0
        %v212 = vsel %vm205, 1, 0
        %v213 = vsel %vm206, 1, 0
        %v214 = vperm.slane %v190, 1
        %vm215 = vcmp.eq.s32.totalorder %v214, %v192
        %vm216 = vcmp.eq.s32.totalorder %v214, %v193
        %vm217 = vcmp.eq.s32.totalorder %v214, %v194
        %vm218 = vcmp.eq.s32.totalorder %v214, %v195
        %vm219 = vcmp.eq.s32.totalorder %v214, %v196
        %vm220 = vcmp.eq.s32.totalorder %v214, %v197
        %vm221 = vcmp.eq.s32.totalorder %v214, %v198
        %v222 = vsel %vm215, 1, 0
        %v223 = vsel %vm216, 1, 0
        %v224 = vsel %vm217, 1, 0
        %v225 = vsel %vm218, 1, 0
        %v226 = vsel %vm219, 1, 0
        %v227 = vsel %vm220, 1, 0
        %v228 = vsel %vm221, 1, 0
        %v229 = vadd.s32 %v207, %v222
        %v230 = vadd.s32 %v208, %v223
        %v231 = vadd.s32 %v209, %v224
        %v232 = vadd.s32 %v210, %v225
        %v233 = vadd.s32 %v211, %v226
        %v234 = vadd.s32 %v212, %v227
        %v235 = vadd.s32 %v213, %v228
        %v236 = vperm.slane %v190, 2
        %vm237 = vcmp.eq.s32.totalorder %v236, %v192
        %vm238 = vcmp.eq.s32.totalorder %v236, %v193
        %vm239 = vcmp.eq.s32.totalorder %v236, %v194
        %vm240 = vcmp.eq.s32.totalorder %v236, %v195
        %vm241 = vcmp.eq.s32.totalorder %v236, %v196
        %vm242 = vcmp.eq.s32.totalorder %v236, %v197
        %vm243 = vcmp.eq.s32.totalorder %v236, %v198
        %v244 = vsel %vm237, 1, 0
        %v245 = vsel %vm238, 1, 0
        %v246 = vsel %vm239, 1, 0
        %v247 = vsel %vm240, 1, 0
        %v248 = vsel %vm241, 1, 0
        %v249 = vsel %vm242, 1, 0
        %v250 = vsel %vm243, 1, 0
        %v251 = vadd.s32 %v229, %v244
        %v252 = vadd.s32 %v230, %v245
        %v253 = vadd.s32 %v231, %v246
        %v254 = vadd.s32 %v232, %v247
        %v255 = vadd.s32 %v233, %v248
        %v256 = vadd.s32 %v234, %v249
        %v257 = vadd.s32 %v235, %v250
        %v258 = vperm.slane %v190, 3
        %vm259 = vcmp.eq.s32.totalorder %v258, %v192
        %vm260 = vcmp.eq.s32.totalorder %v258, %v193
        %vm261 = vcmp.eq.s32.totalorder %v258, %v194
        %vm262 = vcmp.eq.s32.totalorder %v258, %v195
        %vm263 = vcmp.eq.s32.totalorder %v258, %v196
        %vm264 = vcmp.eq.s32.totalorder %v258, %v197
        %vm265 = vcmp.eq.s32.totalorder %v258, %v198
        %v266 = vsel %vm259, 1, 0
        %v267 = vsel %vm260, 1, 0
        %v268 = vsel %vm261, 1, 0
        %v269 = vsel %vm262, 1, 0
        %v270 = vsel %vm263, 1, 0
        %v271 = vsel %vm264, 1, 0
        %v272 = vsel %vm265, 1, 0
        %v273 = vadd.s32 %v251, %v266
        %v274 = vadd.s32 %v252, %v267
        %v275 = vadd.s32 %v253, %v268
        %v276 = vadd.s32 %v254, %v269
        %v277 = vadd.s32 %v255, %v270
        %v278 = vadd.s32 %v256, %v271
        %v279 = vadd.s32 %v257, %v272
        %v280 = vperm.slane %v190, 4
        %vm281 = vcmp.eq.s32.totalorder %v280, %v192
        %vm282 = vcmp.eq.s32.totalorder %v280, %v193
        %vm283 = vcmp.eq.s32.totalorder %v280, %v194
        %vm284 = vcmp.eq.s32.totalorder %v280, %v195
        %vm285 = vcmp.eq.s32.totalorder %v280, %v196
        %vm286 = vcmp.eq.s32.totalorder %v280, %v197
        %vm287 = vcmp.eq.s32.totalorder %v280, %v198
        %v288 = vsel %vm281, 1, 0
        %v289 = vsel %vm282, 1, 0
        %v290 = vsel %vm283, 1, 0
        %v291 = vsel %vm284, 1, 0
        %v292 = vsel %vm285, 1, 0
        %v293 = vsel %vm286, 1, 0
        %v294 = vsel %vm287, 1, 0
        %v295 = vadd.s32 %v273, %v288
        %v296 = vadd.s32 %v274, %v289
        %v297 = vadd.s32 %v275, %v290
        %v298 = vadd.s32 %v276, %v291
        %v299 = vadd.s32 %v277, %v292
        %v300 = vadd.s32 %v278, %v293
        %v301 = vadd.s32 %v279, %v294
        %v302 = vperm.slane %v190, 5
        %vm303 = vcmp.eq.s32.totalorder %v302, %v192
        %vm304 = vcmp.eq.s32.totalorder %v302, %v193
        %vm305 = vcmp.eq.s32.totalorder %v302, %v194
        %vm306 = vcmp.eq.s32.totalorder %v302, %v195
        %vm307 = vcmp.eq.s32.totalorder %v302, %v196
        %vm308 = vcmp.eq.s32.totalorder %v302, %v197
        %vm309 = vcmp.eq.s32.totalorder %v302, %v198
        %v310 = vsel %vm303, 1, 0
        %v311 = vsel %vm304, 1, 0
        %v312 = vsel %vm305, 1, 0
        %v313 = vsel %vm306, 1, 0
        %v314 = vsel %vm307, 1, 0
        %v315 = vsel %vm308, 1, 0
        %v316 = vsel %vm309, 1, 0
        %v317 = vadd.s32 %v295, %v310
        %v318 = vadd.s32 %v296, %v311
        %v319 = vadd.s32 %v297, %v312
        %v320 = vadd.s32 %v298, %v313
        %v321 = vadd.s32 %v299, %v314
        %v322 = vadd.s32 %v300, %v315
        %v323 = vadd.s32 %v301, %v316
        %v324 = vperm.slane %v190, 6
        %vm325 = vcmp.eq.s32.totalorder %v324, %v192
        %vm326 = vcmp.eq.s32.totalorder %v324, %v193
        %vm327 = vcmp.eq.s32.totalorder %v324, %v194
        %vm328 = vcmp.eq.s32.totalorder %v324, %v195
        %vm329 = vcmp.eq.s32.totalorder %v324, %v196
        %vm330 = vcmp.eq.s32.totalorder %v324, %v197
        %vm331 = vcmp.eq.s32.totalorder %v324, %v198
        %v332 = vsel %vm325, 1, 0
        %v333 = vsel %vm326, 1, 0
        %v334 = vsel %vm327, 1, 0
        %v335 = vsel %vm328, 1, 0
        %v336 = vsel %vm329, 1, 0
        %v337 = vsel %vm330, 1, 0
        %v338 = vsel %vm331, 1, 0
        %v339 = vadd.s32 %v317, %v332
        %v340 = vadd.s32 %v318, %v333
        %v341 = vadd.s32 %v319, %v334
        %v342 = vadd.s32 %v320, %v335
        %v343 = vadd.s32 %v321, %v336
        %v344 = vadd.s32 %v322, %v337
        %v345 = vadd.s32 %v323, %v338
        %v346 = vperm.slane %v190, 7
        %vm347 = vcmp.eq.s32.totalorder %v346, %v192
        %vm348 = vcmp.eq.s32.totalorder %v346, %v193
        %vm349 = vcmp.eq.s32.totalorder %v346, %v194
        %vm350 = vcmp.eq.s32.totalorder %v346, %v195
        %vm351 = vcmp.eq.s32.totalorder %v346, %v196
        %vm352 = vcmp.eq.s32.totalorder %v346, %v197
        %vm353 = vcmp.eq.s32.totalorder %v346, %v198
        %v354 = vsel %vm347, 1, 0
        %v355 = vsel %vm348, 1, 0
        %v356 = vsel %vm349, 1, 0
        %v357 = vsel %vm350, 1, 0
        %v358 = vsel %vm351, 1, 0
        %v359 = vsel %vm352, 1, 0
        %v360 = vsel %vm353, 1, 0
        %v361 = vadd.s32 %v339, %v354
        %v362 = vadd.s32 %v340, %v355
        %v363 = vadd.s32 %v341, %v356
        %v364 = vadd.s32 %v342, %v357
        %v365 = vadd.s32 %v343, %v358
        %v366 = vadd.s32 %v344, %v359
        %v367 = vadd.s32 %v345, %v360
        %v368 = vcvt.s32.f32 %v361
        %v369 = vcvt.s32.f32 %v362
        %v370 = vcvt.s32.f32 %v363
        %v371 = vcvt.s32.f32 %v364
        %v372 = vcvt.s32.f32 %v365
        %v373 = vcvt.s32.f32 %v366
        %v374 = vcvt.s32.f32 %v367
        %v375 = vpack.c.bf16 %v369, %v368
        %v376 = vpack.c.bf16 %v371, %v370
        %v377 = vpack.c.bf16 %v373, %v372
        %v378 = vpack.c.bf16 %v374, %v374
        %v379 = vld [vmem:[%s3] sm:$0xff]
        %v380 = vld [vmem:[%s3 + $0x8] sm:$0xff]
        %v381 = vld [vmem:[%s3 + $0x10] sm:$0xff]
        %v382 = vld [vmem:[%s3 + $0x18] sm:$0xff]
        %v383 = vld [vmem:[%s3 + $0x20] sm:$0xff]
        %v384 = vld [vmem:[%s3 + $0x28] sm:$0xff]
        %v385 = vld [vmem:[%s3 + $0x30] sm:$0xff]
        %v386 = vld [vmem:[%s3 + $0x38] sm:$0xff]
        %v387 = vld [vmem:[%s3 + $0x40] sm:$0xff]
        %v388 = vld [vmem:[%s3 + $0x48] sm:$0xff]
        %v389 = vld [vmem:[%s3 + $0x50] sm:$0xff]
        %v390 = vld [vmem:[%s3 + $0x58] sm:$0xff]
        %v391 = vld [vmem:[%s3 + $0x60] sm:$0xff]
        %v392 = vld [vmem:[%s3 + $0x68] sm:$0xff]
        %v393 = vld [vmem:[%s3 + $0x70] sm:$0xff]
        %v394 = vld [vmem:[%s3 + $0x78] sm:$0xff]
        %v395 = vld [vmem:[%s1] sm:$0xf]
        %v396 = vld [vmem:[%s1 + $0x4] sm:$0xf]
        %v397 = vld [vmem:[%s1 + $0x8] sm:$0xf]
        %v398 = vld [vmem:[%s1 + $0xc] sm:$0xf]
        %v399 = vld [vmem:[%s1 + $0x10] sm:$0xf]
        %v400 = vld [vmem:[%s1 + $0x14] sm:$0xf]
        %v401 = vld [vmem:[%s1 + $0x18] sm:$0xf]
        %v402 = vld [vmem:[%s1 + $0x1c] sm:$0xf]
        %v403 = vld [vmem:[%s1 + $0x20] sm:$0xf]
        %v404 = vld [vmem:[%s1 + $0x24] sm:$0xf]
        %v405 = vld [vmem:[%s1 + $0x28] sm:$0xf]
        %v406 = vld [vmem:[%s1 + $0x2c] sm:$0xf]
        %v407 = vld [vmem:[%s1 + $0x30] sm:$0xf]
        %v408 = vld [vmem:[%s1 + $0x34] sm:$0xf]
        %v409 = vld [vmem:[%s1 + $0x38] sm:$0xf]
        %v410 = vld [vmem:[%s1 + $0x3c] sm:$0xf]
        %412 = vset.pattern.permute.xlu0 0
        %413 = vperm.xlu0 %412, %v379
        %v414 = vpop.permute.xlu0 %413
        %417 = vset.pattern.permute.xlu0 0
        %418 = vperm.xlu0 %417, %v380
        %v419 = vpop.permute.xlu0 %418
        %422 = vset.pattern.permute.xlu0 0
        %423 = vperm.xlu0 %422, %v381
        %v424 = vpop.permute.xlu0 %423
        %427 = vset.pattern.permute.xlu0 0
        %428 = vperm.xlu0 %427, %v382
        %v429 = vpop.permute.xlu0 %428
        %432 = vset.pattern.permute.xlu0 0
        %433 = vperm.xlu0 %432, %v383
        %v434 = vpop.permute.xlu0 %433
        %437 = vset.pattern.permute.xlu0 0
        %438 = vperm.xlu0 %437, %v384
        %v439 = vpop.permute.xlu0 %438
        %442 = vset.pattern.permute.xlu0 0
        %443 = vperm.xlu0 %442, %v385
        %v444 = vpop.permute.xlu0 %443
        %447 = vset.pattern.permute.xlu0 0
        %448 = vperm.xlu0 %447, %v386
        %v449 = vpop.permute.xlu0 %448
        %452 = vset.pattern.permute.xlu0 0
        %453 = vperm.xlu0 %452, %v387
        %v454 = vpop.permute.xlu0 %453
        %457 = vset.pattern.permute.xlu0 0
        %458 = vperm.xlu0 %457, %v388
        %v459 = vpop.permute.xlu0 %458
        %462 = vset.pattern.permute.xlu0 0
        %463 = vperm.xlu0 %462, %v389
        %v464 = vpop.permute.xlu0 %463
        %467 = vset.pattern.permute.xlu0 0
        %468 = vperm.xlu0 %467, %v390
        %v469 = vpop.permute.xlu0 %468
        %472 = vset.pattern.permute.xlu0 0
        %473 = vperm.xlu0 %472, %v391
        %v474 = vpop.permute.xlu0 %473
        %477 = vset.pattern.permute.xlu0 0
        %478 = vperm.xlu0 %477, %v392
        %v479 = vpop.permute.xlu0 %478
        %482 = vset.pattern.permute.xlu0 0
        %483 = vperm.xlu0 %482, %v393
        %v484 = vpop.permute.xlu0 %483
        %487 = vset.pattern.permute.xlu0 0
        %488 = vperm.xlu0 %487, %v394
        %v489 = vpop.permute.xlu0 %488
        %v507 = vunpack.c.l.b16 %v395
        %v508 = vunpack.c.l.b16 %v396
        %v509 = vunpack.c.l.b16 %v397
        %v510 = vunpack.c.l.b16 %v398
        %v511 = vunpack.c.l.b16 %v399
        %v512 = vunpack.c.l.b16 %v400
        %v513 = vunpack.c.l.b16 %v401
        %v514 = vunpack.c.l.b16 %v402
        %v515 = vunpack.c.l.b16 %v403
        %v516 = vunpack.c.l.b16 %v404
        %v517 = vunpack.c.l.b16 %v405
        %v518 = vunpack.c.l.b16 %v406
        %v519 = vunpack.c.l.b16 %v407
        %v520 = vunpack.c.l.b16 %v408
        %v521 = vunpack.c.l.b16 %v409
        %v522 = vunpack.c.l.b16 %v410
        %v523 = vpack.c.b16 %v508, %v507
        %v524 = vpack.c.b16 %v510, %v509
        %v525 = vpack.c.b16 %v512, %v511
        %v526 = vpack.c.b16 %v514, %v513
        %v527 = vpack.c.b16 %v516, %v515
        %v528 = vpack.c.b16 %v518, %v517
        %v529 = vpack.c.b16 %v520, %v519
        %v530 = vpack.c.b16 %v522, %v521
        %vm531 = vcmask 408576
        %v533 = vsel %vm531, %v523, 0
        %v536 = vsel %vm531, %v524, 0
        %v539 = vsel %vm531, %v525, 0
        %v542 = vsel %vm531, %v526, 0
        %v545 = vsel %vm531, %v527, 0
        %v548 = vsel %vm531, %v528, 0
        %v551 = vsel %vm531, %v529, 0
        %v554 = vsel %vm531, %v530, 0
        %vm556 = vcmask 1040384
        %v558 = vsel %vm556, %v378, 0
        %560 = vmatpush.bf16.msra.mxu0 0
        %561 = vmatpush.bf16.msra.mxu0 0
        %562 = vmatpush.bf16.msra.mxu0 0
        %563 = vmatpush.bf16.msra.mxu0 0
        %564 = vmatpush.bf16.msra.mxu0 %v558
        %565 = vmatpush.bf16.msra.mxu0 %v377
        %566 = vmatpush.bf16.msra.mxu0 %v376
        %567 = vmatpush.bf16.msra.mxu0 %v375
        %568 = vmatmul.bf16.gmra.mxu0 %v533
        %v569 = vpop.f32.mrf.mxu0
        %v570 = vadd.f32 %v414, %v569
        %v571 = vpop.f32.mrf.mxu0
        %v572 = vadd.f32 %v419, %v571
        %573 = vmatmul.bf16.gmra.mxu0 %v536
        %v574 = vpop.f32.mrf.mxu0
        %v575 = vadd.f32 %v424, %v574
        %v576 = vpop.f32.mrf.mxu0
        %v577 = vadd.f32 %v429, %v576
        %578 = vmatmul.bf16.gmra.mxu0 %v539
        %v579 = vpop.f32.mrf.mxu0
        %v580 = vadd.f32 %v434, %v579
        %v581 = vpop.f32.mrf.mxu0
        %v582 = vadd.f32 %v439, %v581
        %583 = vmatmul.bf16.gmra.mxu0 %v542
        %v584 = vpop.f32.mrf.mxu0
        %v585 = vadd.f32 %v444, %v584
        %v586 = vpop.f32.mrf.mxu0
        %v587 = vadd.f32 %v449, %v586
        %588 = vmatmul.bf16.gmra.mxu0 %v545
        %v589 = vpop.f32.mrf.mxu0
        %v590 = vadd.f32 %v454, %v589
        %v591 = vpop.f32.mrf.mxu0
        %v592 = vadd.f32 %v459, %v591
        %593 = vmatmul.bf16.gmra.mxu0 %v548
        %v594 = vpop.f32.mrf.mxu0
        %v595 = vadd.f32 %v464, %v594
        %v596 = vpop.f32.mrf.mxu0
        %v597 = vadd.f32 %v469, %v596
        %598 = vmatmul.bf16.gmra.mxu0 %v551
        %v599 = vpop.f32.mrf.mxu0
        %v600 = vadd.f32 %v474, %v599
        %v601 = vpop.f32.mrf.mxu0
        %v602 = vadd.f32 %v479, %v601
        %603 = vmatmul.bf16.gmra.mxu0 %v554
        %v604 = vpop.f32.mrf.mxu0
        %v605 = vadd.f32 %v484, %v604
        %v606 = vpop.f32.mrf.mxu0
        %v607 = vadd.f32 %v489, %v606
        %608 = vdwg.mxu0
        %v609 = vmax.f32 %v570, 0.0
        %v610 = vmax.f32 %v572, 0.0
        %v611 = vmax.f32 %v575, 0.0
        %v612 = vmax.f32 %v577, 0.0
        %v613 = vmax.f32 %v580, 0.0
        %v614 = vmax.f32 %v582, 0.0
        %v615 = vmax.f32 %v585, 0.0
        %v616 = vmax.f32 %v587, 0.0
        %v617 = vmax.f32 %v590, 0.0
        %v618 = vmax.f32 %v592, 0.0
        %v619 = vmax.f32 %v595, 0.0
        %v620 = vmax.f32 %v597, 0.0
        %v621 = vmax.f32 %v600, 0.0
        %v622 = vmax.f32 %v602, 0.0
        %v623 = vmax.f32 %v605, 0.0
        %v624 = vmax.f32 %v607, 0.0
        %v625 = vld [vmem:[%s2] sm:$0xf]
        %v626 = vld [vmem:[%s2 + $0x4] sm:$0xf]
        %v627 = vld [vmem:[%s2 + $0x8] sm:$0xf]
        %v628 = vld [vmem:[%s2 + $0xc] sm:$0xf]
        %v629 = vld [vmem:[%s2 + $0x10] sm:$0xf]
        %v630 = vld [vmem:[%s2 + $0x14] sm:$0xf]
        %v631 = vld [vmem:[%s2 + $0x18] sm:$0xf]
        %v632 = vld [vmem:[%s2 + $0x1c] sm:$0xf]
        %v633 = vld [vmem:[%s2 + $0x20] sm:$0xf]
        %v634 = vld [vmem:[%s2 + $0x24] sm:$0xf]
        %v635 = vld [vmem:[%s2 + $0x28] sm:$0xf]
        %v636 = vld [vmem:[%s2 + $0x2c] sm:$0xf]
        %v637 = vld [vmem:[%s2 + $0x30] sm:$0xf]
        %v638 = vld [vmem:[%s2 + $0x34] sm:$0xf]
        %v639 = vld [vmem:[%s2 + $0x38] sm:$0xf]
        %v640 = vld [vmem:[%s2 + $0x3c] sm:$0xf]
        %v641 = vpack.c.bf16 %v610, %v609
        %v642 = vpack.c.bf16 %v612, %v611
        %v643 = vpack.c.bf16 %v614, %v613
        %v644 = vpack.c.bf16 %v616, %v615
        %v645 = vpack.c.bf16 %v618, %v617
        %v646 = vpack.c.bf16 %v620, %v619
        %v647 = vpack.c.bf16 %v622, %v621
        %v648 = vpack.c.bf16 %v624, %v623
        %649 = vset.pattern.permute.xlu0 1
        %650 = vperm.xlu0 %649, %v379
        %v651 = vpop.permute.xlu0 %650
        %653 = vset.pattern.permute.xlu0 1
        %654 = vperm.xlu0 %653, %v380
        %v655 = vpop.permute.xlu0 %654
        %657 = vset.pattern.permute.xlu0 1
        %658 = vperm.xlu0 %657, %v381
        %v659 = vpop.permute.xlu0 %658
        %661 = vset.pattern.permute.xlu0 1
        %662 = vperm.xlu0 %661, %v382
        %v663 = vpop.permute.xlu0 %662
        %665 = vset.pattern.permute.xlu0 1
        %666 = vperm.xlu0 %665, %v383
        %v667 = vpop.permute.xlu0 %666
        %669 = vset.pattern.permute.xlu0 1
        %670 = vperm.xlu0 %669, %v384
        %v671 = vpop.permute.xlu0 %670
        %673 = vset.pattern.permute.xlu0 1
        %674 = vperm.xlu0 %673, %v385
        %v675 = vpop.permute.xlu0 %674
        %677 = vset.pattern.permute.xlu0 1
        %678 = vperm.xlu0 %677, %v386
        %v679 = vpop.permute.xlu0 %678
        %681 = vset.pattern.permute.xlu0 1
        %682 = vperm.xlu0 %681, %v387
        %v683 = vpop.permute.xlu0 %682
        %685 = vset.pattern.permute.xlu0 1
        %686 = vperm.xlu0 %685, %v388
        %v687 = vpop.permute.xlu0 %686
        %689 = vset.pattern.permute.xlu0 1
        %690 = vperm.xlu0 %689, %v389
        %v691 = vpop.permute.xlu0 %690
        %693 = vset.pattern.permute.xlu0 1
        %694 = vperm.xlu0 %693, %v390
        %v695 = vpop.permute.xlu0 %694
        %697 = vset.pattern.permute.xlu0 1
        %698 = vperm.xlu0 %697, %v391
        %v699 = vpop.permute.xlu0 %698
        %701 = vset.pattern.permute.xlu0 1
        %702 = vperm.xlu0 %701, %v392
        %v703 = vpop.permute.xlu0 %702
        %705 = vset.pattern.permute.xlu0 1
        %706 = vperm.xlu0 %705, %v393
        %v707 = vpop.permute.xlu0 %706
        %709 = vset.pattern.permute.xlu0 1
        %710 = vperm.xlu0 %709, %v394
        %v711 = vpop.permute.xlu0 %710
        %v729 = vunpack.c.l.b16 %v625
        %v730 = vunpack.c.l.b16 %v626
        %v731 = vunpack.c.l.b16 %v627
        %v732 = vunpack.c.l.b16 %v628
        %v733 = vunpack.c.l.b16 %v629
        %v734 = vunpack.c.l.b16 %v630
        %v735 = vunpack.c.l.b16 %v631
        %v736 = vunpack.c.l.b16 %v632
        %v737 = vunpack.c.l.b16 %v633
        %v738 = vunpack.c.l.b16 %v634
        %v739 = vunpack.c.l.b16 %v635
        %v740 = vunpack.c.l.b16 %v636
        %v741 = vunpack.c.l.b16 %v637
        %v742 = vunpack.c.l.b16 %v638
        %v743 = vunpack.c.l.b16 %v639
        %v744 = vunpack.c.l.b16 %v640
        %v745 = vpack.c.b16 %v730, %v729
        %v746 = vpack.c.b16 %v732, %v731
        %v747 = vpack.c.b16 %v734, %v733
        %v748 = vpack.c.b16 %v736, %v735
        %v749 = vpack.c.b16 %v738, %v737
        %v750 = vpack.c.b16 %v740, %v739
        %v751 = vpack.c.b16 %v742, %v741
        %v752 = vpack.c.b16 %v744, %v743
        %761 = vmatpush.bf16.msra.mxu0 %v648
        %762 = vmatpush.bf16.msra.mxu0 %v647
        %763 = vmatpush.bf16.msra.mxu0 %v646
        %764 = vmatpush.bf16.msra.mxu0 %v645
        %765 = vmatpush.bf16.msra.mxu0 %v644
        %766 = vmatpush.bf16.msra.mxu0 %v643
        %767 = vmatpush.bf16.msra.mxu0 %v642
        %768 = vmatpush.bf16.msra.mxu0 %v641
        %769 = vmatmul.bf16.gmra.mxu0 %v745
        %v770 = vpop.f32.mrf.mxu0
        %v771 = vadd.f32 %v651, %v770
        %v772 = vpop.f32.mrf.mxu0
        %v773 = vadd.f32 %v655, %v772
        %774 = vmatmul.bf16.gmra.mxu0 %v746
        %v775 = vpop.f32.mrf.mxu0
        %v776 = vadd.f32 %v659, %v775
        %v777 = vpop.f32.mrf.mxu0
        %v778 = vadd.f32 %v663, %v777
        %779 = vmatmul.bf16.gmra.mxu0 %v747
        %v780 = vpop.f32.mrf.mxu0
        %v781 = vadd.f32 %v667, %v780
        %v782 = vpop.f32.mrf.mxu0
        %v783 = vadd.f32 %v671, %v782
        %784 = vmatmul.bf16.gmra.mxu0 %v748
        %v785 = vpop.f32.mrf.mxu0
        %v786 = vadd.f32 %v675, %v785
        %v787 = vpop.f32.mrf.mxu0
        %v788 = vadd.f32 %v679, %v787
        %789 = vmatmul.bf16.gmra.mxu0 %v749
        %v790 = vpop.f32.mrf.mxu0
        %v791 = vadd.f32 %v683, %v790
        %v792 = vpop.f32.mrf.mxu0
        %v793 = vadd.f32 %v687, %v792
        %794 = vmatmul.bf16.gmra.mxu0 %v750
        %v795 = vpop.f32.mrf.mxu0
        %v796 = vadd.f32 %v691, %v795
        %v797 = vpop.f32.mrf.mxu0
        %v798 = vadd.f32 %v695, %v797
        %799 = vmatmul.bf16.gmra.mxu0 %v751
        %v800 = vpop.f32.mrf.mxu0
        %v801 = vadd.f32 %v699, %v800
        %v802 = vpop.f32.mrf.mxu0
        %v803 = vadd.f32 %v703, %v802
        %804 = vmatmul.bf16.gmra.mxu0 %v752
        %v805 = vpop.f32.mrf.mxu0
        %v806 = vadd.f32 %v707, %v805
        %v807 = vpop.f32.mrf.mxu0
        %v808 = vadd.f32 %v711, %v807
        %809 = vdwg.mxu0
        %v810 = vmax.f32 %v771, %v781
        %v811 = vmax.f32 %v773, %v783
        %v812 = vmax.f32 %v776, %v786
        %v813 = vmax.f32 %v778, %v788
        %v814 = vmax.f32 %v810, %v791
        %v815 = vmax.f32 %v811, %v793
        %v816 = vmax.f32 %v812, %v796
        %v817 = vmax.f32 %v813, %v798
        %v818 = vmax.f32 %v814, %v801
        %v819 = vmax.f32 %v815, %v803
        %v820 = vmax.f32 %v816, %v806
        %v821 = vmax.f32 %v817, %v808
        %v822 = vmax.f32 %v818, %v819
        %v823 = vmax.f32 %v820, %v821
        %v824 = vmax.f32 %v822, %v823
        %v825 = vrot.slane %v824, 4
        %v826 = vmax.f32 %v824, %v825
        %v827 = vrot.slane %v826, 2
        %v828 = vmax.f32 %v826, %v827
        %v829 = vrot.slane %v828, 1
        %v830 = vmax.f32 %v828, %v829
        %v831 = vsub.f32 %v771, %v830
        %v832 = vsub.f32 %v773, %v830
        %v833 = vsub.f32 %v776, %v830
        %v834 = vsub.f32 %v778, %v830
        %v835 = vsub.f32 %v781, %v830
        %v836 = vsub.f32 %v783, %v830
        %v837 = vsub.f32 %v786, %v830
        %v838 = vsub.f32 %v788, %v830
        %v839 = vsub.f32 %v791, %v830
        %v840 = vsub.f32 %v793, %v830
        %v841 = vsub.f32 %v796, %v830
        %v842 = vsub.f32 %v798, %v830
        %v843 = vsub.f32 %v801, %v830
        %v844 = vsub.f32 %v803, %v830
        %v845 = vsub.f32 %v806, %v830
        %v846 = vsub.f32 %v808, %v830
        %v847 = vmul.f32 %v831, 1.442695
        %v848 = vpow.pop %v847
        %v849 = vmul.f32 %v832, 1.442695
        %v850 = vpow.pop %v849
        %v851 = vmul.f32 %v833, 1.442695
        %v852 = vpow.pop %v851
        %v853 = vmul.f32 %v834, 1.442695
        %v854 = vpow.pop %v853
        %v855 = vmul.f32 %v835, 1.442695
        %v856 = vpow.pop %v855
        %v857 = vmul.f32 %v836, 1.442695
        %v858 = vpow.pop %v857
        %v859 = vmul.f32 %v837, 1.442695
        %v860 = vpow.pop %v859
        %v861 = vmul.f32 %v838, 1.442695
        %v862 = vpow.pop %v861
        %v863 = vmul.f32 %v839, 1.442695
        %v864 = vpow.pop %v863
        %v865 = vmul.f32 %v840, 1.442695
        %v866 = vpow.pop %v865
        %v867 = vmul.f32 %v841, 1.442695
        %v868 = vpow.pop %v867
        %v869 = vmul.f32 %v842, 1.442695
        %v870 = vpow.pop %v869
        %v871 = vmul.f32 %v843, 1.442695
        %v872 = vpow.pop %v871
        %v873 = vmul.f32 %v844, 1.442695
        %v874 = vpow.pop %v873
        %v875 = vmul.f32 %v845, 1.442695
        %v876 = vpow.pop %v875
        %v877 = vmul.f32 %v846, 1.442695
        %v878 = vpow.pop %v877
        %v879 = vadd.f32 %v848, %v850
        %v880 = vadd.f32 %v879, %v852
        %v881 = vadd.f32 %v880, %v854
        %v882 = vadd.f32 %v881, %v856
        %v883 = vadd.f32 %v882, %v858
        %v884 = vadd.f32 %v883, %v860
        %v885 = vadd.f32 %v884, %v862
        %v886 = vadd.f32 %v885, %v864
        %v887 = vadd.f32 %v886, %v866
        %v888 = vadd.f32 %v887, %v868
        %v889 = vadd.f32 %v888, %v870
        %v890 = vadd.f32 %v889, %v872
        %v891 = vadd.f32 %v890, %v874
        %v892 = vadd.f32 %v891, %v876
        %v893 = vadd.f32 %v892, %v878
        %v894 = vrot.slane %v893, 4
        %v895 = vadd.f32 %v893, %v894
        %v896 = vrot.slane %v895, 2
        %v897 = vadd.f32 %v895, %v896
        %v898 = vrot.slane %v897, 1
        %v899 = vadd.f32 %v897, %v898
        %v900 = vlog2.pop %v899
        %v901 = vmul.f32 %v900, 0.6931472
        %v902 = vsub.f32 %v831, %v901
        %v903 = vsub.f32 %v832, %v901
        %v904 = vsub.f32 %v833, %v901
        %v905 = vsub.f32 %v834, %v901
        %v906 = vsub.f32 %v835, %v901
        %v907 = vsub.f32 %v836, %v901
        %v908 = vsub.f32 %v837, %v901
        %v909 = vsub.f32 %v838, %v901
        %v910 = vsub.f32 %v839, %v901
        %v911 = vsub.f32 %v840, %v901
        %v912 = vsub.f32 %v841, %v901
        %v913 = vsub.f32 %v842, %v901
        %v914 = vsub.f32 %v843, %v901
        %v915 = vsub.f32 %v844, %v901
        %v916 = vsub.f32 %v845, %v901
        %v917 = vsub.f32 %v846, %v901
        %918 = vst [vmem:[%s184] sm:$0xff] %v902
        %919 = vst [vmem:[%s184 + $0x8] sm:$0xff] %v903
        %920 = vst [vmem:[%s184 + $0x10] sm:$0xff] %v904
        %921 = vst [vmem:[%s184 + $0x18] sm:$0xff] %v905
        %922 = vst [vmem:[%s184 + $0x20] sm:$0xff] %v906
        %923 = vst [vmem:[%s184 + $0x28] sm:$0xff] %v907
        %924 = vst [vmem:[%s184 + $0x30] sm:$0xff] %v908
        %925 = vst [vmem:[%s184 + $0x38] sm:$0xff] %v909
        %926 = vst [vmem:[%s184 + $0x40] sm:$0xff] %v910
        %927 = vst [vmem:[%s184 + $0x48] sm:$0xff] %v911
        %928 = vst [vmem:[%s184 + $0x50] sm:$0xff] %v912
        %929 = vst [vmem:[%s184 + $0x58] sm:$0xff] %v913
        %930 = vst [vmem:[%s184 + $0x60] sm:$0xff] %v914
        %931 = vst [vmem:[%s184 + $0x68] sm:$0xff] %v915
        %932 = vst [vmem:[%s184 + $0x70] sm:$0xff] %v916
        %933 = vst [vmem:[%s184 + $0x78] sm:$0xff] %v917
        %s934 = sand.u32 %s112, 1
        %s935 = sand.u32 %s112, 1
        %s936 = smul.addr %s935, 128
        %s937 = scalar_lea.vmem [#allocation2], %s936
        // Predicated region
        $region37: #{cbow_forward_batched.1} parent=35 // pred_check
          %p938 = pneg %p122
        $region38: #{cbow_forward_batched.1} parent=35 // pred_check_branch
          %940 = sbr.rel (%p938) target = $region40
        $region39: #{cbow_forward_batched.1} parent=35 // pred_region
          %s941 = smul.addr %s15, 8
          %s942 = scalar_lea.vmem %s4, %s941
          // Predicated region
          $region41: #{cbow_forward_batched.1} parent=39 // pred_check
            _
          $region42: #{cbow_forward_batched.1} parent=39 // pred_check_branch
            %944 = sbr.rel (0) target = $region44
          $region43: #{cbow_forward_batched.1} parent=39 // pred_region
            // Predicated region
            $region45: #{cbow_forward_batched.1} parent=43 // pred_check
              _
            $region46: #{cbow_forward_batched.1} parent=43 // pred_check_branch
              %946 = sbr.rel (0) target = $region48
            $region47: #{cbow_forward_batched.1} parent=43 // pred_region
              // Predicated region
              $region60: #{cbow_forward_batched.1} parent=47 // pred_check
                _
              $region61: #{cbow_forward_batched.1} parent=47 // pred_check_branch
                %992 = sbr.rel (0) target = $region63
              $region62: #{cbow_forward_batched.1} parent=47 // pred_region
                loop: start=0, step=1, limit=1
                $region64: #{cbow_forward_batched.1} parent=62 // loop_pre_header
                  _
                $region65: #{cbow_forward_batched.1} parent=62 // loop_header
                  %s994 = sphi 0, %s998
                  %p995 = scmp.ge.s32.totalorder %s994, 1
                  %s999 = sphi %s937, %s937
                  %s1000 = sphi %s942, %s942
                $region66: #{cbow_forward_batched.1} parent=62 // loop_header_branch
                  %997 = sbr.rel (%p995) target = $region70
                $region67: #{cbow_forward_batched.1} parent=62 // loop_body
                  %v1001 = vld [vmem:[%s999] sm:$0xff]
                  %1002 = vst [vmem:[%s1000] sm:$0xff] %v1001
                  %v1003 = vld [vmem:[%s999 + $0x8] sm:$0xff]
                  %1004 = vst [vmem:[%s1000 + $0x10] sm:$0xff] %v1003
                  %v1005 = vld [vmem:[%s999 + $0x10] sm:$0xff]
                  %1006 = vst [vmem:[%s1000 + $0x20] sm:$0xff] %v1005
                  %v1007 = vld [vmem:[%s999 + $0x18] sm:$0xff]
                  %1008 = vst [vmem:[%s1000 + $0x30] sm:$0xff] %v1007
                  %v1009 = vld [vmem:[%s999 + $0x20] sm:$0xff]
                  %1010 = vst [vmem:[%s1000 + $0x40] sm:$0xff] %v1009
                  %v1011 = vld [vmem:[%s999 + $0x28] sm:$0xff]
                  %1012 = vst [vmem:[%s1000 + $0x50] sm:$0xff] %v1011
                  %v1013 = vld [vmem:[%s999 + $0x30] sm:$0xff]
                  %1014 = vst [vmem:[%s1000 + $0x60] sm:$0xff] %v1013
                  %v1015 = vld [vmem:[%s999 + $0x38] sm:$0xff]
                  %1016 = vst [vmem:[%s1000 + $0x70] sm:$0xff] %v1015
                  %v1017 = vld [vmem:[%s999 + $0x40] sm:$0xff]
                  %1018 = vst [vmem:[%s1000 + $0x80] sm:$0xff] %v1017
                  %v1019 = vld [vmem:[%s999 + $0x48] sm:$0xff]
                  %1020 = vst [vmem:[%s1000 + $0x90] sm:$0xff] %v1019
                  %v1021 = vld [vmem:[%s999 + $0x50] sm:$0xff]
                  %1022 = vst [vmem:[%s1000 + $0xa0] sm:$0xff] %v1021
                  %v1023 = vld [vmem:[%s999 + $0x58] sm:$0xff]
                  %1024 = vst [vmem:[%s1000 + $0xb0] sm:$0xff] %v1023
                  %v1025 = vld [vmem:[%s999 + $0x60] sm:$0xff]
                  %1026 = vst [vmem:[%s1000 + $0xc0] sm:$0xff] %v1025
                  %v1027 = vld [vmem:[%s999 + $0x68] sm:$0xff]
                  %1028 = vst [vmem:[%s1000 + $0xd0] sm:$0xff] %v1027
                  %v1029 = vld [vmem:[%s999 + $0x70] sm:$0xff]
                  %1030 = vst [vmem:[%s1000 + $0xe0] sm:$0xff] %v1029
                  %v1031 = vld [vmem:[%s999 + $0x78] sm:$0xff]
                  %1032 = vst [vmem:[%s1000 + $0xf0] sm:$0xff] %v1031
                $region68: #{cbow_forward_batched.1} parent=62 // loop_footer
                  %s998 = sadd.s32 1, %s994
                $region69: #{cbow_forward_batched.1} parent=62 // loop_footer_branch
                  %993 = sbr.rel target = $region65
                $region70: #{cbow_forward_batched.1} parent=62 // loop_exit
                  _
              $region63: #{cbow_forward_batched.1} parent=47 // pred_fallthru
                _
              // Predicated region
              $region71: #{cbow_forward_batched.1} parent=47 // pred_check
                _
              $region72: #{cbow_forward_batched.1} parent=47 // pred_check_branch
                %1034 = sbr.rel target = $region74
              $region73: #{cbow_forward_batched.1} parent=47 // pred_region
                _
              $region74: #{cbow_forward_batched.1} parent=47 // pred_fallthru
                _
            $region48: #{cbow_forward_batched.1} parent=43 // pred_fallthru
              _
            // Predicated region
            $region49: #{cbow_forward_batched.1} parent=43 // pred_check
              _
            $region50: #{cbow_forward_batched.1} parent=43 // pred_check_branch
              %948 = sbr.rel target = $region52
            $region51: #{cbow_forward_batched.1} parent=43 // pred_region
              %s950 = ssub.s32 256, 1
              loop: start=0, step=1, limit=1
              $region53: #{cbow_forward_batched.1} parent=51 // loop_pre_header
                _
              $region54: #{cbow_forward_batched.1} parent=51 // loop_header
                %s952 = sphi 0, %s956
                %p953 = scmp.ge.s32.totalorder %s952, 1
                %s957 = sphi %s937, %s937
                %s958 = sphi %s942, %s942
              $region55: #{cbow_forward_batched.1} parent=51 // loop_header_branch
                %955 = sbr.rel (%p953) target = $region59
              $region56: #{cbow_forward_batched.1} parent=51 // loop_body
                %v959 = vld [vmem:[%s957] sm:%s950]
                %960 = vst [vmem:[%s958] sm:%s950] %v959
                %v961 = vld [vmem:[%s957 + $0x8] sm:%s950]
                %962 = vst [vmem:[%s958 + $0x10] sm:%s950] %v961
                %v963 = vld [vmem:[%s957 + $0x10] sm:%s950]
                %964 = vst [vmem:[%s958 + $0x20] sm:%s950] %v963
                %v965 = vld [vmem:[%s957 + $0x18] sm:%s950]
                %966 = vst [vmem:[%s958 + $0x30] sm:%s950] %v965
                %v967 = vld [vmem:[%s957 + $0x20] sm:%s950]
                %968 = vst [vmem:[%s958 + $0x40] sm:%s950] %v967
                %v969 = vld [vmem:[%s957 + $0x28] sm:%s950]
                %970 = vst [vmem:[%s958 + $0x50] sm:%s950] %v969
                %v971 = vld [vmem:[%s957 + $0x30] sm:%s950]
                %972 = vst [vmem:[%s958 + $0x60] sm:%s950] %v971
                %v973 = vld [vmem:[%s957 + $0x38] sm:%s950]
                %974 = vst [vmem:[%s958 + $0x70] sm:%s950] %v973
                %v975 = vld [vmem:[%s957 + $0x40] sm:%s950]
                %976 = vst [vmem:[%s958 + $0x80] sm:%s950] %v975
                %v977 = vld [vmem:[%s957 + $0x48] sm:%s950]
                %978 = vst [vmem:[%s958 + $0x90] sm:%s950] %v977
                %v979 = vld [vmem:[%s957 + $0x50] sm:%s950]
                %980 = vst [vmem:[%s958 + $0xa0] sm:%s950] %v979
                %v981 = vld [vmem:[%s957 + $0x58] sm:%s950]
                %982 = vst [vmem:[%s958 + $0xb0] sm:%s950] %v981
                %v983 = vld [vmem:[%s957 + $0x60] sm:%s950]
                %984 = vst [vmem:[%s958 + $0xc0] sm:%s950] %v983
                %v985 = vld [vmem:[%s957 + $0x68] sm:%s950]
                %986 = vst [vmem:[%s958 + $0xd0] sm:%s950] %v985
                %v987 = vld [vmem:[%s957 + $0x70] sm:%s950]
                %988 = vst [vmem:[%s958 + $0xe0] sm:%s950] %v987
                %v989 = vld [vmem:[%s957 + $0x78] sm:%s950]
                %990 = vst [vmem:[%s958 + $0xf0] sm:%s950] %v989
              $region57: #{cbow_forward_batched.1} parent=51 // loop_footer
                %s956 = sadd.s32 1, %s952
              $region58: #{cbow_forward_batched.1} parent=51 // loop_footer_branch
                %951 = sbr.rel target = $region54
              $region59: #{cbow_forward_batched.1} parent=51 // loop_exit
                _
            $region52: #{cbow_forward_batched.1} parent=43 // pred_fallthru
              _
          $region44: #{cbow_forward_batched.1} parent=39 // pred_fallthru
            _
          %1035 = vnop
        $region40: #{cbow_forward_batched.1} parent=35 // pred_fallthru
          _
      $region36: #{cbow_forward_batched.1} parent=5 // pred_fallthru
        _
      %p1036 = scmp.le.s32.totalorder 2, %s10
      // Predicated region
      $region75: #{cbow_forward_batched.1} parent=5 // pred_check
        %p1037 = pneg %p1036
      $region76: #{cbow_forward_batched.1} parent=5 // pred_check_branch
        %1039 = sbr.rel (%p1037) target = $region78
      $region77: #{cbow_forward_batched.1} parent=5 // pred_region
        %s1040 = ssub.s32 %s10, 2
        // Predicated region
        $region79: #{cbow_forward_batched.1} parent=77 // pred_check
          %p1041 = pneg %p128
        $region80: #{cbow_forward_batched.1} parent=77 // pred_check_branch
          %1043 = sbr.rel (%p1041) target = $region82
        $region81: #{cbow_forward_batched.1} parent=77 // pred_region
          %s1044 = sand.u32 %s113, 1
          %s1045 = sand.u32 %s113, 1
          %s1046 = smul.addr %s1045, 128
          %s1047 = scalar_lea.vmem [#allocation2], %s1046
        $region82: #{cbow_forward_batched.1} parent=77 // pred_fallthru
          _
      $region78: #{cbow_forward_batched.1} parent=5 // pred_fallthru
        _
    $region6: #{cbow_forward_batched.1} parent=1 // loop_footer
      %s14 = sadd.s32 1, %s10
    $region7: #{cbow_forward_batched.1} parent=1 // loop_footer_branch
      %9 = sbr.rel target = $region3
    $region8: #{cbow_forward_batched.1} parent=1 // loop_exit
      _

</llo_original>
